<compile_context>
chip_gen: v7x
topology: tpu7x:2x2x1
jax: 0.10.0
libtpu: 0.0.40
codegen_flags: <defaults>
</compile_context>

<pallas_src>
import functools

import jax
import jax.numpy as jnp
from jax.experimental import pallas as pl
from jax.experimental.pallas import tpu as pltpu

LANES = 128
TILE_R = 1024      # 1024 x 128 x 4B = 512 KiB per input block (x2 inputs x2 bufs = 2 MiB)
NUM_CORES = 2      # leading "parallel" axis: uses both TCs on v7x, harmless elsewhere


def _hinge_kernel(x_ref, t_ref, o_ref, *, margin, n_full_rows, tail_cols,
                  tiles_per_core, block_rows, lanes, need_mask):
    # o_ref is this core's (8, lanes) partial-sum slab; its block index only
    # depends on the leading grid axis, so it stays resident across the inner
    # ("arbitrary") axis and acts as the accumulator.
    @pl.when(pl.program_id(1) == 0)
    def _():
        o_ref[...] = jnp.zeros_like(o_ref)

    # Cast to f32 in-kernel (VPU, hidden under the memory-bound roofline).
    x = x_ref[...].astype(jnp.float32)
    t = t_ref[...].astype(jnp.float32)
    h = jnp.maximum(jnp.float32(margin) - x * t, 0.0)

    if need_mask:
        # Zero contributions from the padded lane tail, the hang-off rows of a
        # partial last block, and clamped "phantom" tiles of the second core.
        tile_idx = pl.program_id(0) * tiles_per_core + pl.program_id(1)
        row = tile_idx * block_rows + jax.lax.broadcasted_iota(
            jnp.int32, h.shape, 0)
        col = jax.lax.broadcasted_iota(jnp.int32, h.shape, 1)
        valid = (row < n_full_rows) | ((row == n_full_rows) & (col < tail_cols))
        h = jnp.where(valid, h, 0.0)

    if block_rows % 8 == 0:
        # Lane/sublane-parallel accumulation: pure VPU adds, no XLU per step.
        o_ref[...] += h.reshape(-1, 8, lanes).sum(axis=0)
    else:
        # Tiny-input fallback (full-array block with rows not a multiple of 8).
        o_ref[0:1, :] += h.sum(axis=0, keepdims=True)


@functools.partial(jax.jit, static_argnames=("margin",))
def hinge_loss(x, target, margin=1.0):
    """Pallas TPU implementation of HingeLoss.forward(input, target)."""
    assert x.shape == target.shape
    n = x.size
    inv_n = 1.0 / n  # exact reciprocal computed in f64 at trace time

    xf = x.reshape(-1)
    tf = target.reshape(-1)

    rem = (-n) % LANES
    if rem:
        # Pad only the sub-128 lane tail so the flat array views as (rows, 128);
        # padded values are masked by index in-kernel (any margin is safe).
        xf = jnp.pad(xf, (0, rem))
        tf = jnp.pad(tf, (0, rem))
    rows = (n + rem) // LANES
    x2 = xf.reshape(rows, LANES)
    t2 = tf.reshape(rows, LANES)

    tile_r = TILE_R if rows >= TILE_R else rows
    total_tiles = pl.cdiv(rows, tile_r)
    tiles_per_core = pl.cdiv(total_tiles, NUM_CORES)
    need_mask = (rem != 0) or (NUM_CORES * tiles_per_core * tile_r != rows)

    def in_index(c, i, _tpc=tiles_per_core, _last=total_tiles - 1):
        # Clamp phantom tiles (beyond the real data) to a valid block index;
        # the in-kernel mask zeroes their contribution.
        return (jnp.minimum(c * _tpc + i, _last), 0)

    kernel = functools.partial(
        _hinge_kernel, margin=float(margin), n_full_rows=n // LANES,
        tail_cols=n % LANES, tiles_per_core=tiles_per_core,
        block_rows=tile_r, lanes=LANES, need_mask=need_mask)

    partials = pl.pallas_call(
        kernel,
        out_shape=jax.ShapeDtypeStruct((NUM_CORES * 8, LANES), jnp.float32),
        grid_spec=pltpu.PrefetchScalarGridSpec(
            num_scalar_prefetch=0,
            grid=(NUM_CORES, tiles_per_core),
            in_specs=[
                pl.BlockSpec((tile_r, LANES), in_index),
                pl.BlockSpec((tile_r, LANES), in_index),
            ],
            out_specs=pl.BlockSpec((8, LANES), lambda c, i: (c, 0)),
        ),
        compiler_params=pltpu.CompilerParams(
            dimension_semantics=("parallel", "arbitrary")),
    )(x2, t2)

    # Single tiny reduce + exact mean, fused into the same jit dispatch.
    return jnp.sum(partials) * inv_n


def hinge_loss_ref(x, target, margin=1.0):
    return jnp.mean(jnp.maximum(margin - x * target, 0.0))


if __name__ == "__main__":
    key = jax.random.PRNGKey(0)
    kx, kt = jax.random.split(key)
    # Small NCHW-style input consistent with the module's elementwise use.
    x = jax.random.normal(kx, (2, 4, 16, 16), dtype=jnp.float32)
    # Targets in {-1, +1} as typical for hinge loss.
    target = jnp.sign(jax.random.normal(kt, (2, 4, 16, 16), dtype=jnp.float32))
    target = jnp.where(target == 0, 1.0, target)

    loss = hinge_loss(x, target)
    jax.block_until_ready(loss)

    ref = hinge_loss_ref(x, target)
    assert jnp.allclose(loss, ref, rtol=1e-5, atol=1e-6), (loss, ref)
    print("KERNEL_OK")
</pallas_src>

<mosaic_0001>
module attributes {stable_mosaic.version = 11 : i64} {
  func.func @_hinge_kernel(%arg0: i32, %arg1: i32, %arg2: memref<16x128xf32, #tpu.memory_space<vmem>>, %arg3: memref<16x128xf32, #tpu.memory_space<vmem>>, %arg4: memref<8x128xf32, #tpu.memory_space<vmem>>) attributes {dimension_semantics = [#tpu.dimension_semantics<parallel>, #tpu.dimension_semantics<arbitrary>], iteration_bounds = array<i64: 2, 1>, scalar_prefetch = 0 : i64, scratch_operands = 0 : i64, tpu.core_type = #tpu.core_type<tc>, window_params = [{transform_indices = @transform_0, window_bounds = array<i64: 16, 128>}, {transform_indices = @transform_1, window_bounds = array<i64: 16, 128>}, {transform_indices = @transform_2, window_bounds = array<i64: 8, 128>}]} {
    %c0_i32 = arith.constant 0 : i32
    %0 = arith.cmpi eq, %arg1, %c0_i32 : i32
    %1 = arith.extui %0 : i1 to i32
    %c0_i32_0 = arith.constant 0 : i32
    %2 = arith.cmpi ne, %1, %c0_i32_0 : i32
    scf.if %2 {
      %cst_14 = arith.constant 0.000000e+00 : f32
      %32 = vector.broadcast %cst_14 : f32 to vector<8x128xf32>
      %c0_15 = arith.constant 0 : index
      %c0_16 = arith.constant 0 : index
      %33 = vector.load %arg4[%c0_15, %c0_16] : memref<8x128xf32, #tpu.memory_space<vmem>>, vector<8x128xf32>
      tpu.vector_store %arg4[%c0_15, %c0_16], %32 {strides = array<i32>} : memref<8x128xf32, #tpu.memory_space<vmem>>, vector<8x128xf32>,
    } else {
    }
    %c0 = arith.constant 0 : index
    %c0_1 = arith.constant 0 : index
    %3 = vector.load %arg2[%c0, %c0_1] : memref<16x128xf32, #tpu.memory_space<vmem>>, vector<16x128xf32>
    %c0_2 = arith.constant 0 : index
    %c0_3 = arith.constant 0 : index
    %4 = vector.load %arg3[%c0_2, %c0_3] : memref<16x128xf32, #tpu.memory_space<vmem>>, vector<16x128xf32>
    %5 = arith.mulf %3, %4 : vector<16x128xf32>
    %cst = arith.constant 1.000000e+00 : f32
    %6 = vector.broadcast %cst : f32 to vector<16x128xf32>
    %7 = arith.subf %6, %5 : vector<16x128xf32>
    %cst_4 = arith.constant 0.000000e+00 : f32
    %8 = vector.broadcast %cst_4 : f32 to vector<16x128xf32>
    %9 = arith.maximumf %7, %8 : vector<16x128xf32>
    %c1_i32 = arith.constant 1 : i32
    %10 = arith.muli %arg0, %c1_i32 : i32
    %11 = arith.addi %10, %arg1 : i32
    %c16_i32 = arith.constant 16 : i32
    %12 = arith.muli %11, %c16_i32 : i32
    %13 = tpu.iota {dimensions = array<i32: 0>} : vector<16x128xi32>
    %14 = vector.broadcast %12 : i32 to vector<16x128xi32>
    %15 = arith.addi %14, %13 : vector<16x128xi32>
    %16 = tpu.iota {dimensions = array<i32: 1>} : vector<16x128xi32>
    %c16_i32_5 = arith.constant 16 : i32
    %17 = vector.broadcast %c16_i32_5 : i32 to vector<16x128xi32>
    %18 = arith.cmpi slt, %15, %17 : vector<16x128xi32>
    %c16_i32_6 = arith.constant 16 : i32
    %19 = vector.broadcast %c16_i32_6 : i32 to vector<16x128xi32>
    %20 = arith.cmpi eq, %15, %19 : vector<16x128xi32>
    %c0_i32_7 = arith.constant 0 : i32
    %21 = vector.broadcast %c0_i32_7 : i32 to vector<16x128xi32>
    %22 = arith.cmpi slt, %16, %21 : vector<16x128xi32>
    %23 = arith.andi %20, %22 : vector<16x128xi1>
    %24 = arith.ori %18, %23 : vector<16x128xi1>
    %cst_8 = arith.constant 0.000000e+00 : f32
    %25 = vector.broadcast %cst_8 : f32 to vector<16x128xf32>
    %26 = arith.select %24, %9, %25 : vector<16x128xi1>, vector<16x128xf32>
    %c0_9 = arith.constant 0 : index
    %c0_10 = arith.constant 0 : index
    %27 = vector.load %arg4[%c0_9, %c0_10] : memref<8x128xf32, #tpu.memory_space<vmem>>, vector<8x128xf32>
    %28 = vector.shape_cast %26 : vector<16x128xf32> to vector<2x8x128xf32>
    %cst_11 = arith.constant dense<0.000000e+00> : vector<8x128xf32>
    %29 = vector.multi_reduction <add>, %28, %cst_11 [0] : vector<2x8x128xf32> to vector<8x128xf32>
    %30 = arith.addf %27, %29 : vector<8x128xf32>
    %c0_12 = arith.constant 0 : index
    %c0_13 = arith.constant 0 : index
    %31 = vector.load %arg4[%c0_12, %c0_13] : memref<8x128xf32, #tpu.memory_space<vmem>>, vector<8x128xf32>
    tpu.vector_store %arg4[%c0_12, %c0_13], %30 {strides = array<i32>} : memref<8x128xf32, #tpu.memory_space<vmem>>, vector<8x128xf32>,
    return
  }
  func.func @transform_0(%arg0: i32, %arg1: i32) -> (i32, i32) {
    %c1_i32 = arith.constant 1 : i32
    %0 = arith.muli %arg0, %c1_i32 : i32
    %1 = arith.addi %0, %arg1 : i32
    %c0_i32 = arith.constant 0 : i32
    %2 = arith.minsi %1, %c0_i32 : i32
    %c0_i32_0 = arith.constant 0 : i32
    %c0_i32_1 = arith.constant 0 : i32
    return %2, %c0_i32_0 : i32, i32
  }
  func.func @transform_1(%arg0: i32, %arg1: i32) -> (i32, i32) {
    %c1_i32 = arith.constant 1 : i32
    %0 = arith.muli %arg0, %c1_i32 : i32
    %1 = arith.addi %0, %arg1 : i32
    %c0_i32 = arith.constant 0 : i32
    %2 = arith.minsi %1, %c0_i32 : i32
    %c0_i32_0 = arith.constant 0 : i32
    %c0_i32_1 = arith.constant 0 : i32
    return %2, %c0_i32_0 : i32, i32
  }
  func.func @transform_2(%arg0: i32, %arg1: i32) -> (i32, i32) {
    %c0_i32 = arith.constant 0 : i32
    %c0_i32_0 = arith.constant 0 : i32
    return %arg0, %c0_i32 : i32, i32
  }
}

</mosaic_0001>

<llo_original>
// kernel: hinge_loss.1
$region0: #{hinge_loss.1}
  #allocation0 [shape = 'u32[]', space=smem, size = 0x4, offset = 0x4, fixed_abs, tag = 'smem constant byte address 0x4 - core index']
  #allocation1 [shape = 'u32[144,128]{1,0:T(1,128)}', space=vmem, size = 0x12000, scoped, tag = 'internal scratch']
  %s0 = inlined_call_operand.vmem [shape: f32[16,128], index: 0, kind: input, shape index: {}]
  %s1 = inlined_call_operand.vmem [shape: f32[16,128], index: 1, kind: input, shape index: {}]
  %s2 = inlined_call_operand.vmem [shape: f32[16,128], index: 2, kind: output, shape index: {}]
  %s3 = sld [smem:[#allocation0]]
  $region45: #{hinge_loss.1} parent=0
    _
  %s5 = ssub.s32 1, %s3
  %s6 = scalar_select 0, %s5, %s3
  loop: start=0, step=1, limit=4
  $region2: #{hinge_loss.1} parent=0 // loop_pre_header
    _
  $region3: #{hinge_loss.1} parent=0 // loop_header
    %s8 = sphi 0, %s12
    %p9 = scmp.ge.s32.totalorder %s8, 4
    %s15 = sphi 0, %s27
    %s16 = sphi 0, %s23
    %s17 = sphi 0, %s15
    %s18 = sphi 0, %s16
    %s19 = sphi 0, %s17
    %s20 = sphi 0, %s18
    %s36 = sphi 0, %s38
    %s39 = sphi 0, %s36
    %s40 = sphi 0, %s39
    %s56 = sphi 0, %s40
    %s68 = sphi 0, %s70
    %s71 = sphi 0, %s68
    %s72 = sphi 0, %s71
    %s88 = sphi 0, %s72
    %s94 = sphi 0, %s96
    %s97 = sphi 0, %s94
    %s98 = sphi 0, %s97
    %s114 = sphi 0, %s98
  $region4: #{hinge_loss.1} parent=0 // loop_header_branch
    %11 = sbr.rel (%p9) target = $region8
  $region5: #{hinge_loss.1} parent=0 // loop_body
    %s13 = ssub.s32 %s8, 1
    %s14 = ssub.s32 %s8, 2
    %s21 = sadd.s32 1, %s16
    %p22 = scmp.ge.s32.totalorder %s21, 1
    %s23 = scalar_select %p22, 0, %s21
    %s24 = sadd.s32 1, %s15
    %s25 = scalar_select %p22, %s24, %s15
    %p26 = scmp.ge.s32.totalorder %s25, 2
    %s27 = scalar_select %p26, 0, %s25
    %s28 = sadd.s32 %s15, %s16
    %p29 = scmp.lt.s32.totalorder %s28, 0
    %s30 = scalar_select %p29, %s28, 0
    %s31 = sadd.s32 %s27, %s23
    %p32 = scmp.lt.s32.totalorder %s31, 0
    %s33 = scalar_select %p32, %s31, 0
    %s34 = ssub.s32 %s30, %s33
    %p35 = scmp.eq.s32.totalorder %s34, 0
    %s37 = sadd.s32 %s36, 1
    %s38 = scalar_select %p35, %s36, %s37
    %p41 = pneg %p35
    %p42 = scmp.eq.s32.totalorder %s8, 1
    %p43 = por %p41, %p42
    %p44 = scmp.ne.s32.totalorder %s36, %s39
    %p45 = scmp.eq.s32.totalorder %s8, 0
    %p46 = por %p44, %p45
    %p47 = scmp.ne.s32.totalorder %s36, %s39
    %p48 = scmp.eq.s32.totalorder %s13, 1
    %p49 = por %p47, %p48
    %p50 = scmp.ne.s32.totalorder %s39, %s40
    %p51 = scmp.eq.s32.totalorder %s13, 0
    %p52 = por %p50, %p51
    %p53 = scmp.ne.s32.totalorder %s39, %s40
    %p54 = scmp.eq.s32.totalorder %s14, 1
    %p55 = por %p53, %p54
    %p57 = scmp.ne.s32.totalorder %s40, %s56
    %p58 = scmp.eq.s32.totalorder %s14, 0
    %p59 = por %p57, %p58
    %s60 = sadd.s32 %s15, %s16
    %p61 = scmp.lt.s32.totalorder %s60, 0
    %s62 = scalar_select %p61, %s60, 0
    %s63 = sadd.s32 %s27, %s23
    %p64 = scmp.lt.s32.totalorder %s63, 0
    %s65 = scalar_select %p64, %s63, 0
    %s66 = ssub.s32 %s62, %s65
    %p67 = scmp.eq.s32.totalorder %s66, 0
    %s69 = sadd.s32 %s68, 1
    %s70 = scalar_select %p67, %s68, %s69
    %p73 = pneg %p67
    %p74 = scmp.eq.s32.totalorder %s8, 1
    %p75 = por %p73, %p74
    %p76 = scmp.ne.s32.totalorder %s68, %s71
    %p77 = scmp.eq.s32.totalorder %s8, 0
    %p78 = por %p76, %p77
    %p79 = scmp.ne.s32.totalorder %s68, %s71
    %p80 = scmp.eq.s32.totalorder %s13, 1
    %p81 = por %p79, %p80
    %p82 = scmp.ne.s32.totalorder %s71, %s72
    %p83 = scmp.eq.s32.totalorder %s13, 0
    %p84 = por %p82, %p83
    %p85 = scmp.ne.s32.totalorder %s71, %s72
    %p86 = scmp.eq.s32.totalorder %s14, 1
    %p87 = por %p85, %p86
    %p89 = scmp.ne.s32.totalorder %s72, %s88
    %p90 = scmp.eq.s32.totalorder %s14, 0
    %p91 = por %p89, %p90
    %s92 = ssub.s32 %s15, %s27
    %p93 = scmp.eq.s32.totalorder %s92, 0
    %s95 = sadd.s32 %s94, 1
    %s96 = scalar_select %p93, %s94, %s95
    %p99 = pneg %p93
    %p100 = scmp.eq.s32.totalorder %s8, 1
    %p101 = por %p99, %p100
    %p102 = scmp.ne.s32.totalorder %s94, %s97
    %p103 = scmp.eq.s32.totalorder %s8, 0
    %p104 = por %p102, %p103
    %p105 = scmp.ne.s32.totalorder %s94, %s97
    %p106 = scmp.eq.s32.totalorder %s13, 1
    %p107 = por %p105, %p106
    %p108 = scmp.ne.s32.totalorder %s97, %s98
    %p109 = scmp.eq.s32.totalorder %s13, 0
    %p110 = por %p108, %p109
    %p111 = scmp.ne.s32.totalorder %s97, %s98
    %p112 = scmp.eq.s32.totalorder %s14, 1
    %p113 = por %p111, %p112
    %p115 = scmp.ne.s32.totalorder %s98, %s114
    %p116 = scmp.eq.s32.totalorder %s14, 0
    %p117 = por %p115, %p116
    %p118 = scmp.le.s32.totalorder 1, %s8
    %p119 = scmp.lt.s32.totalorder %s8, 3
    %p120 = pnand %p118, %p119
    %p121 = pneg %p120
    // Predicated region
    $region9: #{hinge_loss.1} parent=5 // pred_check
      _
    $region10: #{hinge_loss.1} parent=5 // pred_check_branch
      %123 = sbr.rel (%p120) target = $region12
    $region11: #{hinge_loss.1} parent=5 // pred_region
      %s124 = ssub.s32 %s8, 1
    $region12: #{hinge_loss.1} parent=5 // pred_fallthru
      _
    %p125 = scmp.lt.s32.totalorder %s8, 2
    // Predicated region
    $region13: #{hinge_loss.1} parent=5 // pred_check
      %p126 = pneg %p125
    $region14: #{hinge_loss.1} parent=5 // pred_check_branch
      %128 = sbr.rel (%p126) target = $region16
    $region15: #{hinge_loss.1} parent=5 // pred_region
      // Predicated region
      $region17: #{hinge_loss.1} parent=15 // pred_check
        %p129 = pneg %p46
      $region18: #{hinge_loss.1} parent=15 // pred_check_branch
        %131 = sbr.rel (%p129) target = $region20
      $region19: #{hinge_loss.1} parent=15 // pred_region
        %s132 = sadd.s32 %s15, %s16
        %p133 = scmp.lt.s32.totalorder %s132, 0
        %s134 = scalar_select %p133, %s132, 0
        %s135 = smul.u32 2, %s134
        %p136 = scmp.lt.s32.totalorder %s135, 1
        %s137 = scalar_select %p136, %s135, 1
        %s138 = smul.addr %s137, 8
        %s139 = scalar_lea.vmem %s0, %s138
        %s140 = sadd.s32 %s15, %s16
        %p141 = scmp.lt.s32.totalorder %s140, 0
        %s142 = scalar_select %p141, %s140, 0
        %s143 = smul.u32 2, %s142
      $region20: #{hinge_loss.1} parent=15 // pred_fallthru
        _
      // Predicated region
      $region21: #{hinge_loss.1} parent=15 // pred_check
        %p144 = pneg %p78
      $region22: #{hinge_loss.1} parent=15 // pred_check_branch
        %146 = sbr.rel (%p144) target = $region24
      $region23: #{hinge_loss.1} parent=15 // pred_region
        %s147 = sadd.s32 %s15, %s16
        %p148 = scmp.lt.s32.totalorder %s147, 0
        %s149 = scalar_select %p148, %s147, 0
        %s150 = smul.u32 2, %s149
        %p151 = scmp.lt.s32.totalorder %s150, 1
        %s152 = scalar_select %p151, %s150, 1
        %s153 = smul.addr %s152, 8
        %s154 = scalar_lea.vmem %s1, %s153
        %s155 = sadd.s32 %s15, %s16
        %p156 = scmp.lt.s32.totalorder %s155, 0
        %s157 = scalar_select %p156, %s155, 0
        %s158 = smul.u32 2, %s157
      $region24: #{hinge_loss.1} parent=15 // pred_fallthru
        _
    $region16: #{hinge_loss.1} parent=5 // pred_fallthru
      _
    %p159 = scmp.le.s32.totalorder 1, %s8
    %p160 = scmp.lt.s32.totalorder %s8, 3
    %p161 = pnand %p159, %p160
    %p162 = pneg %p161
    // Predicated region
    $region25: #{hinge_loss.1} parent=5 // pred_check
      _
    $region26: #{hinge_loss.1} parent=5 // pred_check_branch
      %164 = sbr.rel (%p161) target = $region28
    $region27: #{hinge_loss.1} parent=5 // pred_region
      %s165 = ssub.s32 %s8, 1
      %s166 = sadd.s32 %s17, %s18
      %p167 = scmp.lt.s32.totalorder %s166, 0
      %s168 = scalar_select %p167, %s166, 0
      %s169 = smul.u32 2, %s168
      %p170 = scmp.lt.s32.totalorder %s169, 1
      %s171 = scalar_select %p170, %s169, 1
      %s172 = smul.addr %s171, 8
      %s173 = scalar_lea.vmem %s0, %s172
      %p174 = pneg %p52
      %p175 = pneg %p49
      %s176 = sadd.s32 %s17, %s18
      %p177 = scmp.lt.s32.totalorder %s176, 0
      %s178 = scalar_select %p177, %s176, 0
      %s179 = smul.u32 2, %s178
      %p180 = scmp.lt.s32.totalorder %s179, 1
      %s181 = scalar_select %p180, %s179, 1
      %s182 = smul.addr %s181, 8
      %s183 = scalar_lea.vmem %s1, %s182
      %p184 = pneg %p84
      %p185 = pneg %p81
      %p186 = pneg %p110
      %p187 = pneg %p107
      %p188 = scmp.lt.s32.totalorder %s17, 1
      %s189 = scalar_select %p188, %s17, 1
      %s190 = smul.addr %s189, 8
      %s191 = scalar_lea.vmem %s2, %s190
      %s192 = sadd.s32 %s17, %s18
      %p193 = scmp.lt.s32.totalorder %s192, 0
      %s194 = scalar_select %p193, %s192, 0
      %s195 = smul.u32 2, %s194
      %p196 = scmp.lt.s32.totalorder %s195, 1
      %s197 = scalar_select %p196, %s195, 1
      %s198 = smul.addr %s197, 8
      %s199 = scalar_lea.vmem %s0, %s198
      %s200 = sadd.s32 %s17, %s18
      %p201 = scmp.lt.s32.totalorder %s200, 0
      %s202 = scalar_select %p201, %s200, 0
      %s203 = smul.u32 2, %s202
      %s204 = sadd.s32 %s17, %s18
      %p205 = scmp.lt.s32.totalorder %s204, 0
      %s206 = scalar_select %p205, %s204, 0
      %s207 = smul.u32 2, %s206
      %p208 = scmp.lt.s32.totalorder %s207, 1
      %s209 = scalar_select %p208, %s207, 1
      %s210 = smul.addr %s209, 8
      %s211 = scalar_lea.vmem %s1, %s210
      %s212 = sadd.s32 %s17, %s18
      %p213 = scmp.lt.s32.totalorder %s212, 0
      %s214 = scalar_select %p213, %s212, 0
      %s215 = smul.u32 2, %s214
      %p216 = scmp.lt.s32.totalorder %s17, 1
      %s217 = scalar_select %p216, %s17, 1
      %s218 = smul.addr %s217, 8
      %s219 = scalar_lea.vmem %s2, %s218
      %p220 = scmp.eq.s32.totalorder %s18, 0
      // Predicated region
      $region29: #{hinge_loss.1} parent=27 // pred_check
        %p221 = pneg %p220
      $region30: #{hinge_loss.1} parent=27 // pred_check_branch
        %223 = sbr.rel (%p221) target = $region32
      $region31: #{hinge_loss.1} parent=27 // pred_region
        %224 = vst [vmem:[%s219] sm:$0xff] 0.0
      $region32: #{hinge_loss.1} parent=27 // pred_fallthru
        _
      %v225 = vld [vmem:[%s199] sm:$0xff]
      %v226 = vld [vmem:[%s199 + $0x8] sm:$0xff]
      %v227 = vld [vmem:[%s211] sm:$0xff]
      %v228 = vld [vmem:[%s211 + $0x8] sm:$0xff]
      %v229 = vmul.f32 %v225, %v227
      %v230 = vmul.f32 %v226, %v228
      %v231 = vsub.f32 1.0, %v229
      %v232 = vsub.f32 1.0, %v230
      %v233 = vmax.f32 %v231, 0.0
      %v234 = vmax.f32 %v232, 0.0
      %s235 = sadd.s32 %s17, %s18
      %s236 = smul.u32 %s235, 16
      %v237 = vlaneseq
      %v238 = vshrl.u32 %v237, 7
      %v239 = vadd.s32 %v238, 8
      %v240 = vstv %s236
      %v241 = vadd.s32 %v240, %v238
      %v242 = vadd.s32 %v240, %v239
      %v243 = vlaneseq
      %v244 = vand.u32 %v243, 127
      %vm245 = vcmp.lt.s32.totalorder %v241, 16
      %vm246 = vcmp.lt.s32.totalorder %v242, 16
      %vm247 = vcmp.eq.s32.totalorder %v241, 16
      %vm248 = vcmp.eq.s32.totalorder %v242, 16
      %vm249 = vcmp.lt.s32.totalorder %v244, 0
      %vm250 = vmand %vm247, %vm249
      %vm251 = vmand %vm248, %vm249
      %vm252 = vmor %vm245, %vm250
      %vm253 = vmor %vm246, %vm251
      %v254 = vsel %vm252, %v233, 0.0
      %v255 = vsel %vm253, %v234, 0.0
      %v256 = vld [vmem:[%s219] sm:$0xff]
      %v257 = vadd.f32 %v254, %v255
      %v258 = vadd.f32 %v256, %v257
      %259 = vst [vmem:[%s219] sm:$0xff] %v258
      %p260 = scmp.lt.s32.totalorder %s17, 1
      %s261 = scalar_select %p260, %s17, 1
      %s262 = smul.addr %s261, 8
      %s263 = scalar_lea.vmem %s2, %s262
      // Predicated region
      $region33: #{hinge_loss.1} parent=27 // pred_check
        %p264 = pneg %p107
      $region34: #{hinge_loss.1} parent=27 // pred_check_branch
        %266 = sbr.rel (%p264) target = $region36
      $region35: #{hinge_loss.1} parent=27 // pred_region
        _
      $region36: #{hinge_loss.1} parent=27 // pred_fallthru
        _
    $region28: #{hinge_loss.1} parent=5 // pred_fallthru
      _
    %p267 = scmp.le.s32.totalorder 2, %s8
    // Predicated region
    $region37: #{hinge_loss.1} parent=5 // pred_check
      %p268 = pneg %p267
    $region38: #{hinge_loss.1} parent=5 // pred_check_branch
      %270 = sbr.rel (%p268) target = $region40
    $region39: #{hinge_loss.1} parent=5 // pred_region
      %s271 = ssub.s32 %s8, 2
      // Predicated region
      $region41: #{hinge_loss.1} parent=39 // pred_check
        %p272 = pneg %p113
      $region42: #{hinge_loss.1} parent=39 // pred_check_branch
        %274 = sbr.rel (%p272) target = $region44
      $region43: #{hinge_loss.1} parent=39 // pred_region
        %p275 = scmp.lt.s32.totalorder %s19, 1
        %s276 = scalar_select %p275, %s19, 1
        %s277 = smul.addr %s276, 8
        %s278 = scalar_lea.vmem %s2, %s277
      $region44: #{hinge_loss.1} parent=39 // pred_fallthru
        _
    $region40: #{hinge_loss.1} parent=5 // pred_fallthru
      _
  $region6: #{hinge_loss.1} parent=0 // loop_footer
    %s12 = sadd.s32 1, %s8
  $region7: #{hinge_loss.1} parent=0 // loop_footer_branch
    %7 = sbr.rel target = $region3
  $region8: #{hinge_loss.1} parent=0 // loop_exit
    _

</llo_original>
